<compile_context>
chip_gen: v7x
topology: tpu7x:2x2x1
jax: 0.10.0
libtpu: 0.0.40
codegen_flags: <defaults>
</compile_context>

<pallas_src>
import functools

import jax
import jax.numpy as jnp
from jax.experimental import pallas as pl
from jax.experimental.pallas import tpu as pltpu

GAMMA = 0.75  # module "parameter" (constant in __init__), set deterministically


def _round_up(x, m):
    return ((x + m - 1) // m) * m


def _focal_spec_grad_kernel(logit_ref, truth_ref, mask_ref, out_ref,
                            loss_acc, tsum_acc, pix_acc, *,
                            gamma, rows_total, binary_truth, ragged):
    s = pl.program_id(1)

    @pl.when(s == 0)
    def _init():
        loss_acc[...] = jnp.zeros_like(loss_acc)
        tsum_acc[...] = jnp.zeros_like(tsum_acc)
        pix_acc[...] = jnp.zeros_like(pix_acc)

    x = logit_ref[0].astype(jnp.float32)    # (C, S, 128)
    t = truth_ref[0].astype(jnp.float32)    # (C, S, 128)  cast BEFORE any sum
    m = mask_ref[0].astype(jnp.float32)     # (1, S, 128)
    C, S, L = x.shape

    if ragged:
        # Last spatial block overhangs the array: rows >= rows_total hold
        # unspecified (stale VMEM) data.  Zero them with a select — a multiply
        # would turn garbage NaN/inf into NaN in the accumulators.
        row = jax.lax.broadcasted_iota(jnp.int32, (1, S, L), 1) + s * S
        valid = row < rows_total
        x = jnp.where(valid, x, 0.0)
        t = jnp.where(valid, t, 0.0)
        m = jnp.where(valid, m, 0.0)

    # ---- BinaryFocalLoss (elementwise, numerically stable) ----
    # stable BCE-with-logits: x - x*t + max(-x,0) + log1p(exp(-|x|))
    log1p_e = jnp.log1p(jnp.exp(-jnp.abs(x)))                    # EUP x2
    bce = x - x * t + jnp.maximum(-x, 0.0) + log1p_e
    z = x * (1.0 - 2.0 * t)
    if binary_truth:
        # t in {0,1}  =>  |z| == |x|  =>  reuse log1p_e (5 -> 3 EUP ops/elem)
        invprobs = jnp.minimum(z, 0.0) - log1p_e
    else:
        # exact logsigmoid for soft labels
        invprobs = jnp.minimum(z, 0.0) - jnp.log1p(jnp.exp(-jnp.abs(z)))
    loss = jnp.exp(invprobs * gamma) * bce                       # EUP x1

    masked = loss * m                                            # mask bcast over C

    # ---- vreg-shaped accumulation (gate applied at finalize) ----
    # Fold the sublane axis in groups of 8: the per-step reduce is pure vreg
    # adds; no per-step cross-lane/sublane XLU work or masked 1-lane stores.
    loss_acc[...] += jnp.sum(masked.reshape(C, S // 8, 8, L), axis=1)  # (C,8,128)
    tsum_acc[...] += jnp.sum(t.reshape(C, S // 8, 8, L), axis=1)       # (C,8,128)
    pix_acc[...] += jnp.sum(m.reshape(S // 8, 8, L), axis=0)           # (8,128)

    @pl.when(s == pl.num_programs(1) - 1)
    def _finalize():
        lsum = jnp.sum(jnp.sum(loss_acc[...], axis=2), axis=1, keepdims=True)  # (C,1)
        tsum = jnp.sum(jnp.sum(tsum_acc[...], axis=2), axis=1, keepdims=True)  # (C,1)
        use = (tsum > 0.0).astype(jnp.float32)                                 # (C,1)
        tot = jnp.sum(lsum * use, axis=0, keepdims=True)                       # (1,1)
        pix = jnp.sum(jnp.sum(pix_acc[...], axis=1, keepdims=True),
                      axis=0, keepdims=True)                                   # (1,1)
        pix = jnp.maximum(pix, 1.0)
        out_ref[...] = (tot / pix).reshape(1, 1, 1).astype(out_ref.dtype)


def binary_focal_wrapped_spec_grad(logit, truth, mask, gamma=GAMMA,
                                   binary_truth=True,
                                   vmem_input_budget=24 * 1024 * 1024,
                                   max_rows=2048):
    B, C, H, W = logit.shape
    HW = H * W
    HW128 = _round_up(HW, 128)

    # Flatten spatial (metadata-only for contiguous trailing dims).
    logit3 = logit.reshape(B, C, HW)
    truth3 = truth.reshape(B, C, HW)
    mask3 = mask.reshape(B, 1, HW)
    if HW128 != HW:
        # Rare fallback: pad by <128 columns only, so the lane-dense 4D view
        # exists.  Zero pads are inert (mask=0, truth=0, loss(x=0) is finite).
        pad = ((0, 0), (0, 0), (0, HW128 - HW))
        logit3 = jnp.pad(logit3, pad)
        truth3 = jnp.pad(truth3, pad)
        mask3 = jnp.pad(mask3, pad)

    R = HW128 // 128                     # rows of 128 lanes
    logit4 = logit3.reshape(B, C, R, 128)
    truth4 = truth3.reshape(B, C, R, 128)
    mask4 = mask3.reshape(B, 1, R, 128)

    # Rows per spatial block: multiple of 8 sublanes, big enough to amortize
    # per-step overhead, small enough that the double-buffered input working
    # set stays inside the VMEM budget (sized for v7x's 64 MiB VMEM).
    bytes_per_row = 128 * (C * (logit4.dtype.itemsize + truth4.dtype.itemsize)
                           + mask4.dtype.itemsize)
    rows = min(vmem_input_budget // (2 * bytes_per_row),
               max_rows, _round_up(R, 8))
    rows = max(8, (rows // 8) * 8)
    n_s = pl.cdiv(R, rows)
    ragged = (n_s * rows != R)

    per_batch = pl.pallas_call(
        functools.partial(_focal_spec_grad_kernel, gamma=gamma, rows_total=R,
                          binary_truth=binary_truth, ragged=ragged),
        out_shape=jax.ShapeDtypeStruct((B, 1, 1), jnp.float32),
        grid_spec=pltpu.PrefetchScalarGridSpec(
            num_scalar_prefetch=0,
            grid=(B, n_s),
            in_specs=[
                pl.BlockSpec((1, C, rows, 128), lambda b, s: (b, 0, s, 0)),
                pl.BlockSpec((1, C, rows, 128), lambda b, s: (b, 0, s, 0)),
                pl.BlockSpec((1, 1, rows, 128), lambda b, s: (b, 0, s, 0)),
            ],
            out_specs=pl.BlockSpec((1, 1, 1), lambda b, s: (b, 0, 0)),
            scratch_shapes=[
                pltpu.VMEM((C, 8, 128), jnp.float32),  # per-channel sum(loss*mask)
                pltpu.VMEM((C, 8, 128), jnp.float32),  # per-channel sum(truth)
                pltpu.VMEM((8, 128), jnp.float32),     # sum(mask) (pixel count)
            ],
        ),
        compiler_params=pltpu.CompilerParams(
            dimension_semantics=("parallel", "arbitrary"),
            vmem_limit_bytes=48 * 1024 * 1024,
        ),
    )(logit4, truth4, mask4)

    # glue: mean over batch
    return jnp.mean(per_batch.reshape(B))


def _reference(logit, truth, mask, gamma=GAMMA):
    # pure-JAX mirror of the PyTorch module, for a sanity check
    x = logit.astype(jnp.float32)
    t = truth.astype(jnp.float32)
    m = mask.astype(jnp.float32)
    max_val = jnp.maximum(-x, 0.0)
    loss = x - x * t + max_val + jnp.log(jnp.exp(-max_val) + jnp.exp(-x - max_val))
    invprobs = jax.nn.log_sigmoid(-x * (t * 2.0 - 1.0))
    loss = jnp.exp(invprobs * gamma) * loss
    pixelnum = jnp.maximum(m.sum(-1).sum(-1), 1.0)                 # (B,)
    should = (t.sum(-1).sum(-1) > 0).astype(jnp.float32)           # (B, C)
    loss = loss * m[:, None, :, :]
    loss = (loss * should[:, :, None, None]).sum(-1).sum(-1).sum(-1) / pixelnum
    return loss.mean()


if __name__ == "__main__":
    B, C, H, W = 2, 4, 16, 16
    key = jax.random.PRNGKey(0)
    k1, k2, k3 = jax.random.split(key, 3)
    logit = jax.random.normal(k1, (B, C, H, W), dtype=jnp.float32)
    # binary truth / mask passed narrow (bf16) -> less HBM read traffic;
    # 0/1 are exactly representable so semantics are unchanged.
    truth = (jax.random.uniform(k2, (B, C, H, W)) > 0.5).astype(jnp.bfloat16)
    mask = (jax.random.uniform(k3, (B, H, W)) > 0.3).astype(jnp.bfloat16)

    out = binary_focal_wrapped_spec_grad(logit, truth, mask)
    out = jax.block_until_ready(out)

    ref = _reference(logit, truth, mask)
    assert jnp.allclose(out, ref, rtol=1e-5, atol=1e-5), (out, ref)

    print("KERNEL_OK")
</pallas_src>

<mosaic_0001>
module attributes {stable_mosaic.version = 11 : i64} {
  func.func @_focal_spec_grad_kernel(%arg0: i32, %arg1: i32, %arg2: memref<1x4x8x128xf32, #tpu.memory_space<vmem>>, %arg3: memref<1x4x8x128xbf16, #tpu.memory_space<vmem>>, %arg4: memref<1x1x8x128xbf16, #tpu.memory_space<vmem>>, %arg5: memref<1x1x1xf32, #tpu.memory_space<vmem>>, %arg6: memref<4x8x128xf32, #tpu.memory_space<vmem>>, %arg7: memref<4x8x128xf32, #tpu.memory_space<vmem>>, %arg8: memref<8x128xf32, #tpu.memory_space<vmem>>) attributes {dimension_semantics = [#tpu.dimension_semantics<parallel>, #tpu.dimension_semantics<arbitrary>], iteration_bounds = array<i64: 2, 1>, scalar_prefetch = 0 : i64, scratch_operands = 3 : i64, tpu.core_type = #tpu.core_type<tc>, window_params = [{transform_indices = @transform_0, window_bounds = array<i64: 1, 4, 8, 128>}, {transform_indices = @transform_1, window_bounds = array<i64: 1, 4, 8, 128>}, {transform_indices = @transform_2, window_bounds = array<i64: 1, 1, 8, 128>}, {transform_indices = @transform_3, window_bounds = array<i64: 1, 1, 1>}]} {
    %c0_i32 = arith.constant 0 : i32
    %0 = arith.cmpi eq, %arg1, %c0_i32 : i32
    %1 = arith.extui %0 : i1 to i32
    %c0_i32_0 = arith.constant 0 : i32
    %2 = arith.cmpi ne, %1, %c0_i32_0 : i32
    scf.if %2 {
      %cst_42 = arith.constant 0.000000e+00 : f32
      %71 = vector.broadcast %cst_42 : f32 to vector<4x8x128xf32>
      %c0_43 = arith.constant 0 : index
      %c0_44 = arith.constant 0 : index
      %c0_45 = arith.constant 0 : index
      %72 = vector.load %arg6[%c0_43, %c0_44, %c0_45] : memref<4x8x128xf32, #tpu.memory_space<vmem>>, vector<4x8x128xf32>
      tpu.vector_store %arg6[%c0_43, %c0_44, %c0_45], %71 {strides = array<i32>} : memref<4x8x128xf32, #tpu.memory_space<vmem>>, vector<4x8x128xf32>,
      %cst_46 = arith.constant 0.000000e+00 : f32
      %73 = vector.broadcast %cst_46 : f32 to vector<4x8x128xf32>
      %c0_47 = arith.constant 0 : index
      %c0_48 = arith.constant 0 : index
      %c0_49 = arith.constant 0 : index
      %74 = vector.load %arg7[%c0_47, %c0_48, %c0_49] : memref<4x8x128xf32, #tpu.memory_space<vmem>>, vector<4x8x128xf32>
      tpu.vector_store %arg7[%c0_47, %c0_48, %c0_49], %73 {strides = array<i32>} : memref<4x8x128xf32, #tpu.memory_space<vmem>>, vector<4x8x128xf32>,
      %cst_50 = arith.constant 0.000000e+00 : f32
      %75 = vector.broadcast %cst_50 : f32 to vector<8x128xf32>
      %c0_51 = arith.constant 0 : index
      %c0_52 = arith.constant 0 : index
      %76 = vector.load %arg8[%c0_51, %c0_52] : memref<8x128xf32, #tpu.memory_space<vmem>>, vector<8x128xf32>
      tpu.vector_store %arg8[%c0_51, %c0_52], %75 {strides = array<i32>} : memref<8x128xf32, #tpu.memory_space<vmem>>, vector<8x128xf32>,
    } else {
    }
    %c0 = arith.constant 0 : index
    %c0_1 = arith.constant 0 : index
    %c0_2 = arith.constant 0 : index
    %c0_3 = arith.constant 0 : index
    %3 = vector.load %arg2[%c0, %c0_1, %c0_2, %c0_3] : memref<1x4x8x128xf32, #tpu.memory_space<vmem>>, vector<1x4x8x128xf32>
    %4 = vector.shape_cast %3 : vector<1x4x8x128xf32> to vector<4x8x128xf32>
    %c0_4 = arith.constant 0 : index
    %c0_5 = arith.constant 0 : index
    %c0_6 = arith.constant 0 : index
    %c0_7 = arith.constant 0 : index
    %5 = vector.load %arg3[%c0_4, %c0_5, %c0_6, %c0_7] : memref<1x4x8x128xbf16, #tpu.memory_space<vmem>>, vector<1x4x8x128xbf16>
    %6 = vector.shape_cast %5 : vector<1x4x8x128xbf16> to vector<4x8x128xbf16>
    %7 = arith.extf %6 : vector<4x8x128xbf16> to vector<4x8x128xf32>
    %c0_8 = arith.constant 0 : index
    %c0_9 = arith.constant 0 : index
    %c0_10 = arith.constant 0 : index
    %c0_11 = arith.constant 0 : index
    %8 = vector.load %arg4[%c0_8, %c0_9, %c0_10, %c0_11] : memref<1x1x8x128xbf16, #tpu.memory_space<vmem>>, vector<1x1x8x128xbf16>
    %9 = vector.shape_cast %8 : vector<1x1x8x128xbf16> to vector<1x8x128xbf16>
    %10 = arith.extf %9 : vector<1x8x128xbf16> to vector<1x8x128xf32>
    %11 = tpu.iota {dimensions = array<i32: 1>} : vector<1x8x128xi32>
    %c8_i32 = arith.constant 8 : i32
    %12 = arith.muli %arg1, %c8_i32 : i32
    %13 = vector.broadcast %12 : i32 to vector<1x8x128xi32>
    %14 = arith.addi %11, %13 : vector<1x8x128xi32>
    %c2_i32 = arith.constant 2 : i32
    %15 = vector.broadcast %c2_i32 : i32 to vector<1x8x128xi32>
    %16 = arith.cmpi slt, %14, %15 : vector<1x8x128xi32>
    %cst = arith.constant 0.000000e+00 : f32
    %17 = vector.shape_cast %16 : vector<1x8x128xi1> to vector<1x8x128xi1>
    %18 = vector.broadcast %17 : vector<1x8x128xi1> to vector<4x8x128xi1>
    %19 = vector.broadcast %cst : f32 to vector<4x8x128xf32>
    %20 = arith.select %18, %4, %19 : vector<4x8x128xi1>, vector<4x8x128xf32>
    %cst_12 = arith.constant 0.000000e+00 : f32
    %21 = vector.shape_cast %16 : vector<1x8x128xi1> to vector<1x8x128xi1>
    %22 = vector.broadcast %21 : vector<1x8x128xi1> to vector<4x8x128xi1>
    %23 = vector.broadcast %cst_12 : f32 to vector<4x8x128xf32>
    %24 = arith.select %22, %7, %23 : vector<4x8x128xi1>, vector<4x8x128xf32>
    %cst_13 = arith.constant 0.000000e+00 : f32
    %25 = vector.broadcast %cst_13 : f32 to vector<1x8x128xf32>
    %26 = arith.select %16, %10, %25 : vector<1x8x128xi1>, vector<1x8x128xf32>
    %27 = math.absf %20 : vector<4x8x128xf32>
    %cst_14 = arith.constant 0.000000e+00 : f32
    %28 = vector.broadcast %cst_14 : f32 to vector<4x8x128xf32>
    %29 = arith.subf %28, %27 : vector<4x8x128xf32>
    %30 = math.exp %29 : vector<4x8x128xf32>
    %31 = math.log1p %30 : vector<4x8x128xf32>
    %32 = arith.mulf %20, %24 : vector<4x8x128xf32>
    %33 = arith.subf %20, %32 : vector<4x8x128xf32>
    %cst_15 = arith.constant 0.000000e+00 : f32
    %34 = vector.broadcast %cst_15 : f32 to vector<4x8x128xf32>
    %35 = arith.subf %34, %20 : vector<4x8x128xf32>
    %cst_16 = arith.constant 0.000000e+00 : f32
    %36 = vector.broadcast %cst_16 : f32 to vector<4x8x128xf32>
    %37 = arith.maximumf %35, %36 : vector<4x8x128xf32>
    %38 = arith.addf %33, %37 : vector<4x8x128xf32>
    %39 = arith.addf %38, %31 : vector<4x8x128xf32>
    %cst_17 = arith.constant 2.000000e+00 : f32
    %40 = vector.broadcast %cst_17 : f32 to vector<4x8x128xf32>
    %41 = arith.mulf %40, %24 : vector<4x8x128xf32>
    %cst_18 = arith.constant 1.000000e+00 : f32
    %42 = vector.broadcast %cst_18 : f32 to vector<4x8x128xf32>
    %43 = arith.subf %42, %41 : vector<4x8x128xf32>
    %44 = arith.mulf %20, %43 : vector<4x8x128xf32>
    %cst_19 = arith.constant 0.000000e+00 : f32
    %45 = vector.broadcast %cst_19 : f32 to vector<4x8x128xf32>
    %46 = arith.minimumf %44, %45 : vector<4x8x128xf32>
    %47 = arith.subf %46, %31 : vector<4x8x128xf32>
    %cst_20 = arith.constant 7.500000e-01 : f32
    %48 = vector.broadcast %cst_20 : f32 to vector<4x8x128xf32>
    %49 = arith.mulf %47, %48 : vector<4x8x128xf32>
    %50 = math.exp %49 : vector<4x8x128xf32>
    %51 = arith.mulf %50, %39 : vector<4x8x128xf32>
    %52 = vector.broadcast %26 : vector<1x8x128xf32> to vector<4x8x128xf32>
    %53 = arith.mulf %51, %52 : vector<4x8x128xf32>
    %c0_21 = arith.constant 0 : index
    %c0_22 = arith.constant 0 : index
    %c0_23 = arith.constant 0 : index
    %54 = vector.load %arg6[%c0_21, %c0_22, %c0_23] : memref<4x8x128xf32, #tpu.memory_space<vmem>>, vector<4x8x128xf32>
    %55 = vector.shape_cast %53 : vector<4x8x128xf32> to vector<4x1x8x128xf32>
    %cst_24 = arith.constant dense<0.000000e+00> : vector<4x8x128xf32>
    %56 = vector.multi_reduction <add>, %55, %cst_24 [1] : vector<4x1x8x128xf32> to vector<4x8x128xf32>
    %57 = arith.addf %54, %56 : vector<4x8x128xf32>
    %c0_25 = arith.constant 0 : index
    %c0_26 = arith.constant 0 : index
    %c0_27 = arith.constant 0 : index
    %58 = vector.load %arg6[%c0_25, %c0_26, %c0_27] : memref<4x8x128xf32, #tpu.memory_space<vmem>>, vector<4x8x128xf32>
    tpu.vector_store %arg6[%c0_25, %c0_26, %c0_27], %57 {strides = array<i32>} : memref<4x8x128xf32, #tpu.memory_space<vmem>>, vector<4x8x128xf32>,
    %c0_28 = arith.constant 0 : index
    %c0_29 = arith.constant 0 : index
    %c0_30 = arith.constant 0 : index
    %59 = vector.load %arg7[%c0_28, %c0_29, %c0_30] : memref<4x8x128xf32, #tpu.memory_space<vmem>>, vector<4x8x128xf32>
    %60 = vector.shape_cast %24 : vector<4x8x128xf32> to vector<4x1x8x128xf32>
    %cst_31 = arith.constant dense<0.000000e+00> : vector<4x8x128xf32>
    %61 = vector.multi_reduction <add>, %60, %cst_31 [1] : vector<4x1x8x128xf32> to vector<4x8x128xf32>
    %62 = arith.addf %59, %61 : vector<4x8x128xf32>
    %c0_32 = arith.constant 0 : index
    %c0_33 = arith.constant 0 : index
    %c0_34 = arith.constant 0 : index
    %63 = vector.load %arg7[%c0_32, %c0_33, %c0_34] : memref<4x8x128xf32, #tpu.memory_space<vmem>>, vector<4x8x128xf32>
    tpu.vector_store %arg7[%c0_32, %c0_33, %c0_34], %62 {strides = array<i32>} : memref<4x8x128xf32, #tpu.memory_space<vmem>>, vector<4x8x128xf32>,
    %c0_35 = arith.constant 0 : index
    %c0_36 = arith.constant 0 : index
    %64 = vector.load %arg8[%c0_35, %c0_36] : memref<8x128xf32, #tpu.memory_space<vmem>>, vector<8x128xf32>
    %cst_37 = arith.constant dense<0.000000e+00> : vector<8x128xf32>
    %65 = vector.multi_reduction <add>, %26, %cst_37 [0] : vector<1x8x128xf32> to vector<8x128xf32>
    %66 = arith.addf %64, %65 : vector<8x128xf32>
    %c0_38 = arith.constant 0 : index
    %c0_39 = arith.constant 0 : index
    %67 = vector.load %arg8[%c0_38, %c0_39] : memref<8x128xf32, #tpu.memory_space<vmem>>, vector<8x128xf32>
    tpu.vector_store %arg8[%c0_38, %c0_39], %66 {strides = array<i32>} : memref<8x128xf32, #tpu.memory_space<vmem>>, vector<8x128xf32>,
    %c0_i32_40 = arith.constant 0 : i32
    %68 = arith.cmpi eq, %arg1, %c0_i32_40 : i32
    %69 = arith.extui %68 : i1 to i32
    %c0_i32_41 = arith.constant 0 : i32
    %70 = arith.cmpi ne, %69, %c0_i32_41 : i32
    scf.if %70 {
      %c0_42 = arith.constant 0 : index
      %c0_43 = arith.constant 0 : index
      %c0_44 = arith.constant 0 : index
      %71 = vector.load %arg6[%c0_42, %c0_43, %c0_44] : memref<4x8x128xf32, #tpu.memory_space<vmem>>, vector<4x8x128xf32>
      %cst_45 = arith.constant dense<0.000000e+00> : vector<4x8xf32>
      %72 = vector.multi_reduction <add>, %71, %cst_45 [2] : vector<4x8x128xf32> to vector<4x8xf32>
      %cst_46 = arith.constant dense<0.000000e+00> : vector<4xf32>
      %73 = vector.multi_reduction <add>, %72, %cst_46 [1] : vector<4x8xf32> to vector<4xf32>
      %74 = vector.shape_cast %73 : vector<4xf32> to vector<4x1xf32>
      %c0_47 = arith.constant 0 : index
      %c0_48 = arith.constant 0 : index
      %c0_49 = arith.constant 0 : index
      %75 = vector.load %arg7[%c0_47, %c0_48, %c0_49] : memref<4x8x128xf32, #tpu.memory_space<vmem>>, vector<4x8x128xf32>
      %cst_50 = arith.constant dense<0.000000e+00> : vector<4x8xf32>
      %76 = vector.multi_reduction <add>, %75, %cst_50 [2] : vector<4x8x128xf32> to vector<4x8xf32>
      %cst_51 = arith.constant dense<0.000000e+00> : vector<4xf32>
      %77 = vector.multi_reduction <add>, %76, %cst_51 [1] : vector<4x8xf32> to vector<4xf32>
      %78 = vector.shape_cast %77 : vector<4xf32> to vector<4x1xf32>
      %cst_52 = arith.constant 0.000000e+00 : f32
      %79 = vector.broadcast %cst_52 : f32 to vector<4x1xf32>
      %80 = arith.cmpf ogt, %78, %79 : vector<4x1xf32>
      %81 = arith.extui %80 : vector<4x1xi1> to vector<4x1xi32>
      %82 = arith.sitofp %81 : vector<4x1xi32> to vector<4x1xf32>
      %83 = arith.mulf %74, %82 : vector<4x1xf32>
      %cst_53 = arith.constant dense<0.000000e+00> : vector<1xf32>
      %84 = vector.multi_reduction <add>, %83, %cst_53 [0] : vector<4x1xf32> to vector<1xf32>
      %85 = vector.shape_cast %84 : vector<1xf32> to vector<1x1xf32>
      %c0_54 = arith.constant 0 : index
      %c0_55 = arith.constant 0 : index
      %86 = vector.load %arg8[%c0_54, %c0_55] : memref<8x128xf32, #tpu.memory_space<vmem>>, vector<8x128xf32>
      %cst_56 = arith.constant dense<0.000000e+00> : vector<8xf32>
      %87 = vector.multi_reduction <add>, %86, %cst_56 [1] : vector<8x128xf32> to vector<8xf32>
      %88 = vector.shape_cast %87 : vector<8xf32> to vector<8x1xf32>
      %cst_57 = arith.constant dense<0.000000e+00> : vector<1xf32>
      %89 = vector.multi_reduction <add>, %88, %cst_57 [0] : vector<8x1xf32> to vector<1xf32>
      %90 = vector.shape_cast %89 : vector<1xf32> to vector<1x1xf32>
      %cst_58 = arith.constant 1.000000e+00 : f32
      %91 = vector.broadcast %cst_58 : f32 to vector<1x1xf32>
      %92 = arith.maximumf %90, %91 : vector<1x1xf32>
      %93 = arith.divf %85, %92 : vector<1x1xf32>
      %94 = vector.shape_cast %93 : vector<1x1xf32> to vector<1x1x1xf32>
      %c0_59 = arith.constant 0 : index
      %c0_60 = arith.constant 0 : index
      %c0_61 = arith.constant 0 : index
      %95 = vector.load %arg5[%c0_59, %c0_60, %c0_61] : memref<1x1x1xf32, #tpu.memory_space<vmem>>, vector<1x1x1xf32>
      tpu.vector_store %arg5[%c0_59, %c0_60, %c0_61], %94 {strides = array<i32>} : memref<1x1x1xf32, #tpu.memory_space<vmem>>, vector<1x1x1xf32>,
    } else {
    }
    return
  }
  func.func @transform_0(%arg0: i32, %arg1: i32) -> (i32, i32, i32, i32) {
    %c0_i32 = arith.constant 0 : i32
    %c0_i32_0 = arith.constant 0 : i32
    %c0_i32_1 = arith.constant 0 : i32
    return %arg0, %c0_i32, %arg1, %c0_i32_0 : i32, i32, i32, i32
  }
  func.func @transform_1(%arg0: i32, %arg1: i32) -> (i32, i32, i32, i32) {
    %c0_i32 = arith.constant 0 : i32
    %c0_i32_0 = arith.constant 0 : i32
    %c0_i32_1 = arith.constant 0 : i32
    return %arg0, %c0_i32, %arg1, %c0_i32_0 : i32, i32, i32, i32
  }
  func.func @transform_2(%arg0: i32, %arg1: i32) -> (i32, i32, i32, i32) {
    %c0_i32 = arith.constant 0 : i32
    %c0_i32_0 = arith.constant 0 : i32
    %c0_i32_1 = arith.constant 0 : i32
    return %arg0, %c0_i32, %arg1, %c0_i32_0 : i32, i32, i32, i32
  }
  func.func @transform_3(%arg0: i32, %arg1: i32) -> (i32, i32, i32) {
    %c0_i32 = arith.constant 0 : i32
    %c0_i32_0 = arith.constant 0 : i32
    %c0_i32_1 = arith.constant 0 : i32
    return %arg0, %c0_i32, %c0_i32_0 : i32, i32, i32
  }
}

</mosaic_0001>

<llo_original>
// kernel: tpu_custom_call.1
$region0: #{tpu_custom_call.1}
  #allocation0 [shape = 'u32[]', space=smem, size = 0x4, offset = 0x4, fixed_abs, tag = 'smem constant byte address 0x4 - core index']
  #allocation1 [shape = 'u32[144,128]{1,0:T(1,128)}', space=vmem, size = 0x12000, scoped, tag = 'internal scratch']
  #allocation2 [shape = 'f32[4,8,128]{2,1,0:T(8,128)}', space=vmem, size = 0x4000, scoped, tag = 'scratch operand']
  #allocation3 [shape = 'f32[4,8,128]{2,1,0:T(8,128)}', space=vmem, size = 0x4000, scoped, tag = 'scratch operand']
  #allocation4 [shape = 'f32[8,128]{1,0:T(8,128)}', space=vmem, size = 0x1000, scoped, tag = 'scratch operand']
  #allocation9 [shape = 's32[]', space=sflag, size = 0x4, offset = 0, fixed_abs, tag = 'sflag constant byte address 0x0 - dummy sync flag']
  #allocation11 [shape = 's32[]', space=sflag, size = 0x4, offset = 0, fixed_abs, tag = 'sflag constant byte address 0x0 - dummy sync flag']
  %s0 = inlined_call_operand.hbm [shape: f32[2,4,2,128], index: 0, kind: input, shape index: {}]
  %s1 = inlined_call_operand.hbm [shape: bf16[2,4,2,128], index: 1, kind: input, shape index: {}]
  %s2 = inlined_call_operand.vmem [shape: bf16[2,1,2,128], index: 2, kind: input, shape index: {}]
  %s3 = inlined_call_operand.vmem [shape: f32[2,1,1], index: 3, kind: output, shape index: {}]
  %s4 = sld [smem:[#allocation0]]
  $region61: #{tpu_custom_call.1} parent=0
    _
  %s6 = ssub.s32 1, %s4
  %s7 = scalar_select 0, %s6, %s4
  $region1: #{tpu_custom_call.1} parent=0
    #allocation5 [shape = 'u8[32768]{0}', space=vmem, size = 0x8000, scoped, tag = 'input window, operand 0']
    #allocation6 [shape = 's32[2]{0}', space=sflag, size = 0x8, scoped, tag = 'scoped memory for tpu_custom_call.1']
    #allocation7 [shape = 'u8[16384]{0}', space=vmem, size = 0x4000, scoped, tag = 'input window, operand 1']
    #allocation8 [shape = 's32[2]{0}', space=sflag, size = 0x8, scoped, tag = 'scoped memory for tpu_custom_call.1']
    %8 = vsyncpa [#allocation6], 0
    %s9 = scalar_lea.sflag [#allocation6], 1
    %10 = vsyncpa %s9, 0
    %11 = vsyncpa [#allocation8], 0
    %s12 = scalar_lea.sflag [#allocation8], 1
    %13 = vsyncpa %s12, 0
    loop: start=0, step=1, limit=4
    $region2: #{tpu_custom_call.1} parent=1 // loop_pre_header
      _
    $region3: #{tpu_custom_call.1} parent=1 // loop_header
      %s15 = sphi 0, %s19
      %p16 = scmp.ge.s32.totalorder %s15, 4
      %s22 = sphi 0, %s34
      %s23 = sphi 0, %s30
      %s24 = sphi 0, %s22
      %s25 = sphi 0, %s23
      %s26 = sphi 0, %s24
      %s27 = sphi 0, %s25
      %s39 = sphi 0, %s41
      %s42 = sphi 0, %s39
      %s43 = sphi 0, %s42
      %s59 = sphi 0, %s43
      %s67 = sphi 0, %s69
      %s70 = sphi 0, %s67
      %s71 = sphi 0, %s70
      %s87 = sphi 0, %s71
      %s95 = sphi 0, %s97
      %s98 = sphi 0, %s95
      %s99 = sphi 0, %s98
      %s115 = sphi 0, %s99
      %s121 = sphi 0, %s123
      %s124 = sphi 0, %s121
      %s125 = sphi 0, %s124
      %s141 = sphi 0, %s125
    $region4: #{tpu_custom_call.1} parent=1 // loop_header_branch
      %18 = sbr.rel (%p16) target = $region8
    $region5: #{tpu_custom_call.1} parent=1 // loop_body
      %s20 = ssub.s32 %s15, 1
      %s21 = ssub.s32 %s15, 2
      %s28 = sadd.s32 1, %s23
      %p29 = scmp.ge.s32.totalorder %s28, 1
      %s30 = scalar_select %p29, 0, %s28
      %s31 = sadd.s32 1, %s22
      %s32 = scalar_select %p29, %s31, %s22
      %p33 = scmp.ge.s32.totalorder %s32, 2
      %s34 = scalar_select %p33, 0, %s32
      %s35 = ssub.s32 %s22, %s34
      %s36 = ssub.s32 %s23, %s30
      %s37 = sor.u32 %s35, %s36
      %p38 = scmp.eq.s32.totalorder %s37, 0
      %s40 = sadd.s32 %s39, 1
      %s41 = scalar_select %p38, %s39, %s40
      %p44 = pneg %p38
      %p45 = scmp.eq.s32.totalorder %s15, 1
      %p46 = por %p44, %p45
      %p47 = scmp.ne.s32.totalorder %s39, %s42
      %p48 = scmp.eq.s32.totalorder %s15, 0
      %p49 = por %p47, %p48
      %p50 = scmp.ne.s32.totalorder %s39, %s42
      %p51 = scmp.eq.s32.totalorder %s20, 1
      %p52 = por %p50, %p51
      %p53 = scmp.ne.s32.totalorder %s42, %s43
      %p54 = scmp.eq.s32.totalorder %s20, 0
      %p55 = por %p53, %p54
      %p56 = scmp.ne.s32.totalorder %s42, %s43
      %p57 = scmp.eq.s32.totalorder %s21, 1
      %p58 = por %p56, %p57
      %p60 = scmp.ne.s32.totalorder %s43, %s59
      %p61 = scmp.eq.s32.totalorder %s21, 0
      %p62 = por %p60, %p61
      %s63 = ssub.s32 %s22, %s34
      %s64 = ssub.s32 %s23, %s30
      %s65 = sor.u32 %s63, %s64
      %p66 = scmp.eq.s32.totalorder %s65, 0
      %s68 = sadd.s32 %s67, 1
      %s69 = scalar_select %p66, %s67, %s68
      %p72 = pneg %p66
      %p73 = scmp.eq.s32.totalorder %s15, 1
      %p74 = por %p72, %p73
      %p75 = scmp.ne.s32.totalorder %s67, %s70
      %p76 = scmp.eq.s32.totalorder %s15, 0
      %p77 = por %p75, %p76
      %p78 = scmp.ne.s32.totalorder %s67, %s70
      %p79 = scmp.eq.s32.totalorder %s20, 1
      %p80 = por %p78, %p79
      %p81 = scmp.ne.s32.totalorder %s70, %s71
      %p82 = scmp.eq.s32.totalorder %s20, 0
      %p83 = por %p81, %p82
      %p84 = scmp.ne.s32.totalorder %s70, %s71
      %p85 = scmp.eq.s32.totalorder %s21, 1
      %p86 = por %p84, %p85
      %p88 = scmp.ne.s32.totalorder %s71, %s87
      %p89 = scmp.eq.s32.totalorder %s21, 0
      %p90 = por %p88, %p89
      %s91 = ssub.s32 %s22, %s34
      %s92 = ssub.s32 %s23, %s30
      %s93 = sor.u32 %s91, %s92
      %p94 = scmp.eq.s32.totalorder %s93, 0
      %s96 = sadd.s32 %s95, 1
      %s97 = scalar_select %p94, %s95, %s96
      %p100 = pneg %p94
      %p101 = scmp.eq.s32.totalorder %s15, 1
      %p102 = por %p100, %p101
      %p103 = scmp.ne.s32.totalorder %s95, %s98
      %p104 = scmp.eq.s32.totalorder %s15, 0
      %p105 = por %p103, %p104
      %p106 = scmp.ne.s32.totalorder %s95, %s98
      %p107 = scmp.eq.s32.totalorder %s20, 1
      %p108 = por %p106, %p107
      %p109 = scmp.ne.s32.totalorder %s98, %s99
      %p110 = scmp.eq.s32.totalorder %s20, 0
      %p111 = por %p109, %p110
      %p112 = scmp.ne.s32.totalorder %s98, %s99
      %p113 = scmp.eq.s32.totalorder %s21, 1
      %p114 = por %p112, %p113
      %p116 = scmp.ne.s32.totalorder %s99, %s115
      %p117 = scmp.eq.s32.totalorder %s21, 0
      %p118 = por %p116, %p117
      %s119 = ssub.s32 %s22, %s34
      %p120 = scmp.eq.s32.totalorder %s119, 0
      %s122 = sadd.s32 %s121, 1
      %s123 = scalar_select %p120, %s121, %s122
      %p126 = pneg %p120
      %p127 = scmp.eq.s32.totalorder %s15, 1
      %p128 = por %p126, %p127
      %p129 = scmp.ne.s32.totalorder %s121, %s124
      %p130 = scmp.eq.s32.totalorder %s15, 0
      %p131 = por %p129, %p130
      %p132 = scmp.ne.s32.totalorder %s121, %s124
      %p133 = scmp.eq.s32.totalorder %s20, 1
      %p134 = por %p132, %p133
      %p135 = scmp.ne.s32.totalorder %s124, %s125
      %p136 = scmp.eq.s32.totalorder %s20, 0
      %p137 = por %p135, %p136
      %p138 = scmp.ne.s32.totalorder %s124, %s125
      %p139 = scmp.eq.s32.totalorder %s21, 1
      %p140 = por %p138, %p139
      %p142 = scmp.ne.s32.totalorder %s125, %s141
      %p143 = scmp.eq.s32.totalorder %s21, 0
      %p144 = por %p142, %p143
      %p145 = scmp.le.s32.totalorder 1, %s15
      %p146 = scmp.lt.s32.totalorder %s15, 3
      %p147 = pnand %p145, %p146
      %p148 = pneg %p147
      // Predicated region
      $region9: #{tpu_custom_call.1} parent=5 // pred_check
        _
      $region10: #{tpu_custom_call.1} parent=5 // pred_check_branch
        %150 = sbr.rel (%p147) target = $region12
      $region11: #{tpu_custom_call.1} parent=5 // pred_region
        %s151 = ssub.s32 %s15, 1
      $region12: #{tpu_custom_call.1} parent=5 // pred_fallthru
        _
      %p152 = scmp.lt.s32.totalorder %s15, 2
      // Predicated region
      $region13: #{tpu_custom_call.1} parent=5 // pred_check
        %p153 = pneg %p152
      $region14: #{tpu_custom_call.1} parent=5 // pred_check_branch
        %155 = sbr.rel (%p153) target = $region16
      $region15: #{tpu_custom_call.1} parent=5 // pred_region
        // Predicated region
        $region17: #{tpu_custom_call.1} parent=15 // pred_check
          %p156 = pneg %p49
        $region18: #{tpu_custom_call.1} parent=15 // pred_check_branch
          %158 = sbr.rel (%p156) target = $region20
        $region19: #{tpu_custom_call.1} parent=15 // pred_region
          #allocation10 [shape = 'u32[6]{0}', space=smem, size = 0x18, scoped, tag = 'DMA stride descriptor']
          %s159 = sand.u32 %s39, 1
          %s160 = scalar_lea.sflag [#allocation6], %s159
          %s161 = sand.u32 %s39, 1
          %s162 = smul.addr %s161, 32
          %s163 = scalar_lea.vmem [#allocation5], %s162
          %s164 = smul.u32 4, %s23
          %s165 = ssub.s32 1, %s164
          %s166 = smul.u32 128, %s165
          %s168 = ssub.s32 512, %s166
          %169 = vsyncadd %s160, %s168
          %p170 = scmp.ne.s32.totalorder 0, %s166
          %s171 = smul.addr %s22, 4
          %s172 = sadd.s32 %s164, %s171
          %s173 = smul.addr %s172, 32
          %s174 = scalar_lea.hbm %s0, %s173
          %s175 = smul.u32 2, %s165
          %s176 = smul.u32 %s175, 4
          %s178 = sshll.u32 1, 14
          %s179 = sxor.u32 4294967295, %s178
          %s181 = sld [smem:[#allocation0]]
          %s182 = sadd.s32 2, %s181
          %s184 = sshll.u32 7, 26
          %s185 = sxor.u32 4294967295, %s184
          %s186 = sand.u32 0, %s185
          %s187 = sshll.u32 %s182, 26
          %s188 = sor.u32 %s186, %s187
          %s189 = sshll.u32 %s163, 4
          %s190 = int_to_ptr.vmem [resolvable:$true] %s189
          %s191 = sshll.u32 %s176, 4
          %196 = sst [smem:[#allocation10]] 32
          %s197 = scalar_lea.smem [#allocation10], 1
          %198 = sst [smem:[%s197]] 128
          %s199 = scalar_lea.smem [#allocation10], 2
          %200 = sst [smem:[%s199]] %s165
          %s201 = scalar_lea.smem [#allocation10], 3
          %202 = sst [smem:[%s201]] 32
          %s203 = scalar_lea.smem [#allocation10], 4
          %204 = sst [smem:[%s203]] 32
          %s205 = scalar_lea.smem [#allocation10], 5
          %206 = sst [smem:[%s205]] 2
          %208 = dma.general (%p170), %s174, %s191, %s190, %s160, [#allocation9], [#allocation10], %s188, 0
        $region20: #{tpu_custom_call.1} parent=15 // pred_fallthru
          _
        // Predicated region
        $region21: #{tpu_custom_call.1} parent=15 // pred_check
          %p209 = pneg %p77
        $region22: #{tpu_custom_call.1} parent=15 // pred_check_branch
          %211 = sbr.rel (%p209) target = $region24
        $region23: #{tpu_custom_call.1} parent=15 // pred_region
          #allocation12 [shape = 'u32[6]{0}', space=smem, size = 0x18, scoped, tag = 'DMA stride descriptor']
          %s212 = sand.u32 %s67, 1
          %s213 = scalar_lea.sflag [#allocation8], %s212
          %s214 = sand.u32 %s67, 1
          %s215 = smul.addr %s214, 16
          %s216 = scalar_lea.vmem [#allocation7], %s215
          %s217 = smul.u32 4, %s23
          %s218 = ssub.s32 1, %s217
          %s219 = smul.u32 64, %s218
          %s221 = ssub.s32 256, %s219
          %222 = vsyncadd %s213, %s221
          %p223 = scmp.ne.s32.totalorder 0, %s219
          %s224 = smul.addr %s22, 4
          %s225 = sadd.s32 %s217, %s224
          %s226 = smul.addr %s225, 16
          %s227 = scalar_lea.hbm %s1, %s226
          %s228 = smul.u32 %s218, 4
          %s230 = sshll.u32 1, 14
          %s231 = sxor.u32 4294967295, %s230
          %s233 = sld [smem:[#allocation0]]
          %s234 = sadd.s32 2, %s233
          %s236 = sshll.u32 7, 26
          %s237 = sxor.u32 4294967295, %s236
          %s238 = sand.u32 0, %s237
          %s239 = sshll.u32 %s234, 26
          %s240 = sor.u32 %s238, %s239
          %s241 = sshll.u32 %s216, 4
          %s242 = int_to_ptr.vmem [resolvable:$true] %s241
          %s243 = sshll.u32 %s228, 4
          %248 = sst [smem:[#allocation12]] 16
          %s249 = scalar_lea.smem [#allocation12], 1
          %250 = sst [smem:[%s249]] 64
          %s251 = scalar_lea.smem [#allocation12], 2
          %252 = sst [smem:[%s251]] %s218
          %s253 = scalar_lea.smem [#allocation12], 3
          %254 = sst [smem:[%s253]] 16
          %s255 = scalar_lea.smem [#allocation12], 4
          %256 = sst [smem:[%s255]] 16
          %s257 = scalar_lea.smem [#allocation12], 5
          %258 = sst [smem:[%s257]] 1
          %260 = dma.general (%p223), %s227, %s243, %s242, %s213, [#allocation11], [#allocation12], %s240, 0
        $region24: #{tpu_custom_call.1} parent=15 // pred_fallthru
          _
        // Predicated region
        $region25: #{tpu_custom_call.1} parent=15 // pred_check
          %p261 = pneg %p105
        $region26: #{tpu_custom_call.1} parent=15 // pred_check_branch
          %263 = sbr.rel (%p261) target = $region28
        $region27: #{tpu_custom_call.1} parent=15 // pred_region
          %s264 = smul.u32 4, %s23
          %s265 = ssub.s32 1, %s264
          %s266 = smul.u32 16, %s265
          %p267 = scmp.lt.s32.totalorder %s22, 1
          %s268 = scalar_select %p267, %s22, 1
          %p269 = scmp.lt.s32.totalorder %s264, 0
          %s270 = scalar_select %p269, %s264, 0
          %s271 = sadd.s32 %s270, %s268
          %s272 = scalar_lea.vmem %s2, %s271
          %s273 = smul.u32 4, %s23
          %s274 = ssub.s32 1, %s273
          %s275 = smul.u32 16, %s274
        $region28: #{tpu_custom_call.1} parent=15 // pred_fallthru
          _
      $region16: #{tpu_custom_call.1} parent=5 // pred_fallthru
        _
      %p276 = scmp.le.s32.totalorder 1, %s15
      %p277 = scmp.lt.s32.totalorder %s15, 3
      %p278 = pnand %p276, %p277
      %p279 = pneg %p278
      // Predicated region
      $region29: #{tpu_custom_call.1} parent=5 // pred_check
        _
      $region30: #{tpu_custom_call.1} parent=5 // pred_check_branch
        %281 = sbr.rel (%p278) target = $region32
      $region31: #{tpu_custom_call.1} parent=5 // pred_region
        %s282 = ssub.s32 %s15, 1
        %s283 = sand.u32 %s42, 1
        %s284 = scalar_lea.sflag [#allocation6], %s283
        %s285 = sand.u32 %s42, 1
        %s286 = smul.addr %s285, 32
        %s287 = scalar_lea.vmem [#allocation5], %s286
        // Predicated region
        $region33: #{tpu_custom_call.1} parent=31 // pred_check
          %p288 = pneg %p55
        $region34: #{tpu_custom_call.1} parent=31 // pred_check_branch
          %290 = sbr.rel (%p288) target = $region36
        $region35: #{tpu_custom_call.1} parent=31 // pred_region
          %291 = dma.done %s284, 512
        $region36: #{tpu_custom_call.1} parent=31 // pred_fallthru
          _
        %s292 = sand.u32 %s70, 1
        %s293 = scalar_lea.sflag [#allocation8], %s292
        %s294 = sand.u32 %s70, 1
        %s295 = smul.addr %s294, 16
        %s296 = scalar_lea.vmem [#allocation7], %s295
        // Predicated region
        $region37: #{tpu_custom_call.1} parent=31 // pred_check
          %p297 = pneg %p83
        $region38: #{tpu_custom_call.1} parent=31 // pred_check_branch
          %299 = sbr.rel (%p297) target = $region40
        $region39: #{tpu_custom_call.1} parent=31 // pred_region
          %300 = dma.done %s293, 256
        $region40: #{tpu_custom_call.1} parent=31 // pred_fallthru
          _
        %s301 = sand.u32 %s42, 1
        %s302 = scalar_lea.sflag [#allocation6], %s301
        %s303 = sand.u32 %s42, 1
        %s304 = smul.addr %s303, 32
        %s305 = scalar_lea.vmem [#allocation5], %s304
        %p306 = pneg %p55
        %p307 = pneg %p52
        %s308 = sand.u32 %s70, 1
        %s309 = scalar_lea.sflag [#allocation8], %s308
        %s310 = sand.u32 %s70, 1
        %s311 = smul.addr %s310, 16
        %s312 = scalar_lea.vmem [#allocation7], %s311
        %p313 = pneg %p83
        %p314 = pneg %p80
        %s315 = smul.u32 4, %s25
        %s316 = ssub.s32 1, %s315
        %s317 = smul.u32 16, %s316
        %p318 = scmp.lt.s32.totalorder %s24, 1
        %s319 = scalar_select %p318, %s24, 1
        %p320 = scmp.lt.s32.totalorder %s315, 0
        %s321 = scalar_select %p320, %s315, 0
        %s322 = sadd.s32 %s321, %s319
        %s323 = scalar_lea.vmem %s2, %s322
        %p324 = pneg %p111
        %p325 = pneg %p108
        %p326 = pneg %p137
        %p327 = pneg %p134
        %p328 = scmp.lt.s32.totalorder %s24, 1
        %s329 = scalar_select %p328, %s24, 1
        %s330 = scalar_lea.vmem %s3, %s329
        %s331 = smul.u32 4, %s25
        %s332 = ssub.s32 1, %s331
        %s333 = smul.u32 128, %s332
        %s334 = smul.u32 4, %s25
        %s335 = ssub.s32 1, %s334
        %s336 = smul.u32 64, %s335
        %s337 = smul.u32 4, %s25
        %s338 = ssub.s32 1, %s337
        %s339 = smul.u32 16, %s338
        %p340 = scmp.lt.s32.totalorder %s24, 1
        %s341 = scalar_select %p340, %s24, 1
        %p342 = scmp.lt.s32.totalorder %s337, 0
        %s343 = scalar_select %p342, %s337, 0
        %s344 = sadd.s32 %s343, %s341
        %s345 = scalar_lea.vmem %s2, %s344
        %s346 = smul.u32 4, %s25
        %s347 = ssub.s32 1, %s346
        %s348 = smul.u32 16, %s347
        %p349 = scmp.lt.s32.totalorder %s24, 1
        %s350 = scalar_select %p349, %s24, 1
        %s351 = scalar_lea.vmem %s3, %s350
        %p352 = scmp.eq.s32.totalorder %s25, 0
        // Predicated region
        $region41: #{tpu_custom_call.1} parent=31 // pred_check
          %p353 = pneg %p352
        $region42: #{tpu_custom_call.1} parent=31 // pred_check_branch
          %355 = sbr.rel (%p353) target = $region44
        $region43: #{tpu_custom_call.1} parent=31 // pred_region
          %356 = vst [vmem:[#allocation2] sm:$0xff] 0.0
          %357 = vst [vmem:[#allocation2 + $0x8] sm:$0xff] 0.0
          %358 = vst [vmem:[#allocation2 + $0x10] sm:$0xff] 0.0
          %359 = vst [vmem:[#allocation2 + $0x18] sm:$0xff] 0.0
          %360 = vst [vmem:[#allocation3] sm:$0xff] 0.0
          %361 = vst [vmem:[#allocation3 + $0x8] sm:$0xff] 0.0
          %362 = vst [vmem:[#allocation3 + $0x10] sm:$0xff] 0.0
          %363 = vst [vmem:[#allocation3 + $0x18] sm:$0xff] 0.0
          %364 = vst [vmem:[#allocation4] sm:$0xff] 0.0
        $region44: #{tpu_custom_call.1} parent=31 // pred_fallthru
          _
        %v365 = vld [vmem:[%s287] sm:$0xff]
        %v366 = vld [vmem:[%s287 + $0x8] sm:$0xff]
        %v367 = vld [vmem:[%s287 + $0x10] sm:$0xff]
        %v368 = vld [vmem:[%s287 + $0x18] sm:$0xff]
        %v369 = vld [vmem:[%s296] sm:$0x1]
        %v370 = vld [vmem:[%s296 + $0x1] sm:$0x1]
        %v371 = vld [vmem:[%s296 + $0x2] sm:$0x1]
        %v372 = vld [vmem:[%s296 + $0x3] sm:$0x1]
        %v373 = vld [vmem:[%s296 + $0x4] sm:$0x1]
        %v374 = vld [vmem:[%s296 + $0x5] sm:$0x1]
        %v375 = vld [vmem:[%s296 + $0x6] sm:$0x1]
        %v376 = vld [vmem:[%s296 + $0x7] sm:$0x1]
        %v377 = vld [vmem:[%s296 + $0x8] sm:$0x1]
        %v378 = vld [vmem:[%s296 + $0x9] sm:$0x1]
        %v379 = vld [vmem:[%s296 + $0xa] sm:$0x1]
        %v380 = vld [vmem:[%s296 + $0xb] sm:$0x1]
        %v381 = vld [vmem:[%s296 + $0xc] sm:$0x1]
        %v382 = vld [vmem:[%s296 + $0xd] sm:$0x1]
        %v383 = vld [vmem:[%s296 + $0xe] sm:$0x1]
        %v384 = vld [vmem:[%s296 + $0xf] sm:$0x1]
        %v385 = vunpack.c.l.bf16 %v369
        %v386 = vunpack.c.l.bf16 %v370
        %v387 = vunpack.c.l.bf16 %v371
        %v388 = vunpack.c.l.bf16 %v372
        %v389 = vunpack.c.l.bf16 %v373
        %v390 = vunpack.c.l.bf16 %v374
        %v391 = vunpack.c.l.bf16 %v375
        %v392 = vunpack.c.l.bf16 %v376
        %v393 = vunpack.c.l.bf16 %v377
        %v394 = vunpack.c.l.bf16 %v378
        %v395 = vunpack.c.l.bf16 %v379
        %v396 = vunpack.c.l.bf16 %v380
        %v397 = vunpack.c.l.bf16 %v381
        %v398 = vunpack.c.l.bf16 %v382
        %v399 = vunpack.c.l.bf16 %v383
        %v400 = vunpack.c.l.bf16 %v384
        %v401 = vld [vmem:[%s345] sm:$0x1]
        %v402 = vld [vmem:[%s345 + $0x1] sm:$0x1]
        %v403 = vld [vmem:[%s345 + $0x2] sm:$0x1]
        %v404 = vld [vmem:[%s345 + $0x3] sm:$0x1]
        %v405 = vunpack.c.l.bf16 %v401
        %v406 = vunpack.c.l.bf16 %v402
        %v407 = vunpack.c.l.bf16 %v403
        %v408 = vunpack.c.l.bf16 %v404
        %v409 = vlaneseq
        %v410 = vshrl.u32 %v409, 7
        %s411 = smul.u32 %s25, 8
        %v412 = vstv %s411
        %v413 = vadd.s32 %v410, %v412
        %vm414 = vcmp.lt.s32.totalorder %v413, 2
        %v415 = vsel %vm414, 1, 0
        %vm416 = vcmp.eq.s32.totalorder %v415, 1
        %v417 = vsel %vm416, %v365, 0.0
        %v418 = vsel %vm416, %v366, 0.0
        %v419 = vsel %vm416, %v367, 0.0
        %v420 = vsel %vm416, %v368, 0.0
        %v437 = vcombine.low %v385, %v386
        %v438 = vcombine.low %v387, %v388
        %v440 = vunpack.c.l.s4 1983009808
        %v441 = vunpack.c.0.s8 %v440
        %v442 = vlaneseq
        %v443 = vshrl.u32 %v442, 7
        %v444 = vsub.s32 %v441, %v443
        %v445 = vrot.slane %v437, %v444
        %v447 = vunpack.c.l.s4 1983009808
        %v448 = vunpack.c.0.s8 %v447
        %v449 = vlaneseq
        %v450 = vshrl.u32 %v449, 7
        %v451 = vsub.s32 %v448, %v450
        %v452 = vrot.slane %v438, %v451
        %v453 = vcombine.low %v445, %v452
        %v454 = vcombine.low %v389, %v390
        %v455 = vcombine.low %v391, %v392
        %v457 = vunpack.c.l.s4 1983009808
        %v458 = vunpack.c.0.s8 %v457
        %v459 = vlaneseq
        %v460 = vshrl.u32 %v459, 7
        %v461 = vsub.s32 %v458, %v460
        %v462 = vrot.slane %v454, %v461
        %v464 = vunpack.c.l.s4 1983009808
        %v465 = vunpack.c.0.s8 %v464
        %v466 = vlaneseq
        %v467 = vshrl.u32 %v466, 7
        %v468 = vsub.s32 %v465, %v467
        %v469 = vrot.slane %v455, %v468
        %v470 = vcombine.low %v462, %v469
        %v471 = vcombine.low %v393, %v394
        %v472 = vcombine.low %v395, %v396
        %v474 = vunpack.c.l.s4 1983009808
        %v475 = vunpack.c.0.s8 %v474
        %v476 = vlaneseq
        %v477 = vshrl.u32 %v476, 7
        %v478 = vsub.s32 %v475, %v477
        %v479 = vrot.slane %v471, %v478
        %v481 = vunpack.c.l.s4 1983009808
        %v482 = vunpack.c.0.s8 %v481
        %v483 = vlaneseq
        %v484 = vshrl.u32 %v483, 7
        %v485 = vsub.s32 %v482, %v484
        %v486 = vrot.slane %v472, %v485
        %v487 = vcombine.low %v479, %v486
        %v488 = vcombine.low %v397, %v398
        %v489 = vcombine.low %v399, %v400
        %v491 = vunpack.c.l.s4 1983009808
        %v492 = vunpack.c.0.s8 %v491
        %v493 = vlaneseq
        %v494 = vshrl.u32 %v493, 7
        %v495 = vsub.s32 %v492, %v494
        %v496 = vrot.slane %v488, %v495
        %v498 = vunpack.c.l.s4 1983009808
        %v499 = vunpack.c.0.s8 %v498
        %v500 = vlaneseq
        %v501 = vshrl.u32 %v500, 7
        %v502 = vsub.s32 %v499, %v501
        %v503 = vrot.slane %v489, %v502
        %v504 = vcombine.low %v496, %v503
        %v509 = vsel %vm416, %v453, 0.0
        %v510 = vsel %vm416, %v470, 0.0
        %v511 = vsel %vm416, %v487, 0.0
        %v512 = vsel %vm416, %v504, 0.0
        %v517 = vcombine.low %v405, %v406
        %v518 = vcombine.low %v407, %v408
        %v520 = vunpack.c.l.s4 1983009808
        %v521 = vunpack.c.0.s8 %v520
        %v522 = vlaneseq
        %v523 = vshrl.u32 %v522, 7
        %v524 = vsub.s32 %v521, %v523
        %v525 = vrot.slane %v517, %v524
        %v527 = vunpack.c.l.s4 1983009808
        %v528 = vunpack.c.0.s8 %v527
        %v529 = vlaneseq
        %v530 = vshrl.u32 %v529, 7
        %v531 = vsub.s32 %v528, %v530
        %v532 = vrot.slane %v518, %v531
        %v533 = vcombine.low %v525, %v532
        %v535 = vsel %vm414, %v533, 0.0
        %v536 = vand.u32 2147483647, %v417
        %v537 = vand.u32 2147483647, %v418
        %v538 = vand.u32 2147483647, %v419
        %v539 = vand.u32 2147483647, %v420
        %v540 = vsub.f32 0.0, %v536
        %v541 = vsub.f32 0.0, %v537
        %v542 = vsub.f32 0.0, %v538
        %v543 = vsub.f32 0.0, %v539
        %v544 = vmul.f32 %v540, 1.442695
        %v545 = vpow.pop %v544
        %v546 = vmul.f32 %v541, 1.442695
        %v547 = vpow.pop %v546
        %v548 = vmul.f32 %v542, 1.442695
        %v549 = vpow.pop %v548
        %v550 = vmul.f32 %v543, 1.442695
        %v551 = vpow.pop %v550
        %v552 = vadd.f32 %v545, 1.0
        %v553 = vlog2.pop %v552
        %v554 = vmul.f32 %v553, 0.6931472
        %v555 = vmul.f32 -0.5, %v545
        %v556 = vadd.f32 %v555, 1.0
        %v557 = vmul.f32 %v556, %v545
        %v558 = vand.u32 2147483647, %v545
        %vm559 = vcmp.lt.f32.partialorder %v558, 0.0004427343
        %v560 = vsel %vm559, %v557, %v554
        %v561 = vadd.f32 %v547, 1.0
        %v562 = vlog2.pop %v561
        %v563 = vmul.f32 %v562, 0.6931472
        %v564 = vmul.f32 -0.5, %v547
        %v565 = vadd.f32 %v564, 1.0
        %v566 = vmul.f32 %v565, %v547
        %v567 = vand.u32 2147483647, %v547
        %vm568 = vcmp.lt.f32.partialorder %v567, 0.0004427343
        %v569 = vsel %vm568, %v566, %v563
        %v570 = vadd.f32 %v549, 1.0
        %v571 = vlog2.pop %v570
        %v572 = vmul.f32 %v571, 0.6931472
        %v573 = vmul.f32 -0.5, %v549
        %v574 = vadd.f32 %v573, 1.0
        %v575 = vmul.f32 %v574, %v549
        %v576 = vand.u32 2147483647, %v549
        %vm577 = vcmp.lt.f32.partialorder %v576, 0.0004427343
        %v578 = vsel %vm577, %v575, %v572
        %v579 = vadd.f32 %v551, 1.0
        %v580 = vlog2.pop %v579
        %v581 = vmul.f32 %v580, 0.6931472
        %v582 = vmul.f32 -0.5, %v551
        %v583 = vadd.f32 %v582, 1.0
        %v584 = vmul.f32 %v583, %v551
        %v585 = vand.u32 2147483647, %v551
        %vm586 = vcmp.lt.f32.partialorder %v585, 0.0004427343
        %v587 = vsel %vm586, %v584, %v581
        %v588 = vmul.f32 %v417, %v509
        %v589 = vmul.f32 %v418, %v510
        %v590 = vmul.f32 %v419, %v511
        %v591 = vmul.f32 %v420, %v512
        %v592 = vsub.f32 %v417, %v588
        %v593 = vsub.f32 %v418, %v589
        %v594 = vsub.f32 %v419, %v590
        %v595 = vsub.f32 %v420, %v591
        %v596 = vsub.f32 0.0, %v417
        %v597 = vsub.f32 0.0, %v418
        %v598 = vsub.f32 0.0, %v419
        %v599 = vsub.f32 0.0, %v420
        %v600 = vmax.f32 %v596, 0.0
        %v601 = vmax.f32 %v597, 0.0
        %v602 = vmax.f32 %v598, 0.0
        %v603 = vmax.f32 %v599, 0.0
        %v604 = vadd.f32 %v592, %v600
        %v605 = vadd.f32 %v593, %v601
        %v606 = vadd.f32 %v594, %v602
        %v607 = vadd.f32 %v595, %v603
        %v608 = vadd.f32 %v604, %v560
        %v609 = vadd.f32 %v605, %v569
        %v610 = vadd.f32 %v606, %v578
        %v611 = vadd.f32 %v607, %v587
        %v612 = vmul.f32 %v509, 2.0
        %v613 = vmul.f32 %v510, 2.0
        %v614 = vmul.f32 %v511, 2.0
        %v615 = vmul.f32 %v512, 2.0
        %v616 = vsub.f32 1.0, %v612
        %v617 = vsub.f32 1.0, %v613
        %v618 = vsub.f32 1.0, %v614
        %v619 = vsub.f32 1.0, %v615
        %v620 = vmul.f32 %v417, %v616
        %v621 = vmul.f32 %v418, %v617
        %v622 = vmul.f32 %v419, %v618
        %v623 = vmul.f32 %v420, %v619
        %v624 = vmin.f32 %v620, 0.0
        %v625 = vmin.f32 %v621, 0.0
        %v626 = vmin.f32 %v622, 0.0
        %v627 = vmin.f32 %v623, 0.0
        %v628 = vsub.f32 %v624, %v560
        %v629 = vsub.f32 %v625, %v569
        %v630 = vsub.f32 %v626, %v578
        %v631 = vsub.f32 %v627, %v587
        %v632 = vmul.f32 %v628, 0.75
        %v633 = vmul.f32 %v629, 0.75
        %v634 = vmul.f32 %v630, 0.75
        %v635 = vmul.f32 %v631, 0.75
        %v636 = vmul.f32 %v632, 1.442695
        %v637 = vpow.pop %v636
        %v638 = vmul.f32 %v633, 1.442695
        %v639 = vpow.pop %v638
        %v640 = vmul.f32 %v634, 1.442695
        %v641 = vpow.pop %v640
        %v642 = vmul.f32 %v635, 1.442695
        %v643 = vpow.pop %v642
        %v644 = vmul.f32 %v637, %v608
        %v645 = vmul.f32 %v639, %v609
        %v646 = vmul.f32 %v641, %v610
        %v647 = vmul.f32 %v643, %v611
        %v648 = vmul.f32 %v644, %v535
        %v649 = vmul.f32 %v645, %v535
        %v650 = vmul.f32 %v646, %v535
        %v651 = vmul.f32 %v647, %v535
        %v652 = vld [vmem:[#allocation2] sm:$0xff]
        %v653 = vld [vmem:[#allocation2 + $0x8] sm:$0xff]
        %v654 = vld [vmem:[#allocation2 + $0x10] sm:$0xff]
        %v655 = vld [vmem:[#allocation2 + $0x18] sm:$0xff]
        %v656 = vadd.f32 %v648, 0.0
        %v657 = vadd.f32 %v649, 0.0
        %v658 = vadd.f32 %v650, 0.0
        %v659 = vadd.f32 %v651, 0.0
        %v660 = vadd.f32 %v652, %v656
        %v661 = vadd.f32 %v653, %v657
        %v662 = vadd.f32 %v654, %v658
        %v663 = vadd.f32 %v655, %v659
        %664 = vst [vmem:[#allocation2] sm:$0xff] %v660
        %665 = vst [vmem:[#allocation2 + $0x8] sm:$0xff] %v661
        %666 = vst [vmem:[#allocation2 + $0x10] sm:$0xff] %v662
        %667 = vst [vmem:[#allocation2 + $0x18] sm:$0xff] %v663
        %v668 = vld [vmem:[#allocation3] sm:$0xff]
        %v669 = vld [vmem:[#allocation3 + $0x8] sm:$0xff]
        %v670 = vld [vmem:[#allocation3 + $0x10] sm:$0xff]
        %v671 = vld [vmem:[#allocation3 + $0x18] sm:$0xff]
        %v672 = vadd.f32 %v509, 0.0
        %v673 = vadd.f32 %v510, 0.0
        %v674 = vadd.f32 %v511, 0.0
        %v675 = vadd.f32 %v512, 0.0
        %v676 = vadd.f32 %v668, %v672
        %v677 = vadd.f32 %v669, %v673
        %v678 = vadd.f32 %v670, %v674
        %v679 = vadd.f32 %v671, %v675
        %680 = vst [vmem:[#allocation3] sm:$0xff] %v676
        %681 = vst [vmem:[#allocation3 + $0x8] sm:$0xff] %v677
        %682 = vst [vmem:[#allocation3 + $0x10] sm:$0xff] %v678
        %683 = vst [vmem:[#allocation3 + $0x18] sm:$0xff] %v679
        %v684 = vld [vmem:[#allocation4] sm:$0xff]
        %v685 = vadd.f32 %v535, 0.0
        %v686 = vadd.f32 %v684, %v685
        %687 = vst [vmem:[#allocation4] sm:$0xff] %v686
        // Predicated region
        $region45: #{tpu_custom_call.1} parent=31 // pred_check
          %p688 = pneg %p352
        $region46: #{tpu_custom_call.1} parent=31 // pred_check_branch
          %690 = sbr.rel (%p688) target = $region48
        $region47: #{tpu_custom_call.1} parent=31 // pred_region
          %v691 = vld [vmem:[#allocation2] sm:$0xff]
          %v692 = vld [vmem:[#allocation2 + $0x8] sm:$0xff]
          %v693 = vld [vmem:[#allocation2 + $0x10] sm:$0xff]
          %v694 = vld [vmem:[#allocation2 + $0x18] sm:$0xff]
          %695 = vadd.xlane.f32.xlu0 %v691
          %v696 = vpop.xlane.xlu0 %695
          %697 = vadd.xlane.f32.xlu0 %v692
          %v698 = vpop.xlane.xlu0 %697
          %699 = vadd.xlane.f32.xlu0 %v693
          %v700 = vpop.xlane.xlu0 %699
          %701 = vadd.xlane.f32.xlu0 %v694
          %v702 = vpop.xlane.xlu0 %701
          %v707 = vlaneseq
          %v708 = vand.u32 %v707, 127
          %v709 = vlaneseq
          %v710 = vshrl.u32 %v709, 7
          %v711 = vsub.s32 %v708, %v710
          %v712 = vrot.slane %v696, %v711
          %v713 = vlaneseq
          %v714 = vshrl.u32 %v713, 7
          %v715 = vsub.s32 %v708, %v714
          %v716 = vrot.slane %v698, %v715
          %v717 = vlaneseq
          %v718 = vshrl.u32 %v717, 7
          %v719 = vsub.s32 %v708, %v718
          %v720 = vrot.slane %v700, %v719
          %v721 = vlaneseq
          %v722 = vshrl.u32 %v721, 7
          %v723 = vsub.s32 %v708, %v722
          %v724 = vrot.slane %v702, %v723
          %vm725 = vcmask 1041409
          %v726 = vsel %vm725, %v716, %v712
          %vm727 = vcmask 1042434
          %v728 = vsel %vm727, %v720, %v726
          %vm729 = vcmask 1043459
          %v730 = vsel %vm729, %v724, %v728
          %vm732 = vcmask 60416
          %v733 = vsel %vm732, %v730, 0.0
          %734 = vadd.xlane.f32.xlu0 %v733
          %v735 = vpop.xlane.xlu0 %734
          %v736 = vld [vmem:[#allocation3] sm:$0xff]
          %v737 = vld [vmem:[#allocation3 + $0x8] sm:$0xff]
          %v738 = vld [vmem:[#allocation3 + $0x10] sm:$0xff]
          %v739 = vld [vmem:[#allocation3 + $0x18] sm:$0xff]
          %740 = vadd.xlane.f32.xlu0 %v736
          %v741 = vpop.xlane.xlu0 %740
          %742 = vadd.xlane.f32.xlu0 %v737
          %v743 = vpop.xlane.xlu0 %742
          %744 = vadd.xlane.f32.xlu0 %v738
          %v745 = vpop.xlane.xlu0 %744
          %746 = vadd.xlane.f32.xlu0 %v739
          %v747 = vpop.xlane.xlu0 %746
          %v752 = vlaneseq
          %v753 = vshrl.u32 %v752, 7
          %v754 = vsub.s32 %v708, %v753
          %v755 = vrot.slane %v741, %v754
          %v756 = vlaneseq
          %v757 = vshrl.u32 %v756, 7
          %v758 = vsub.s32 %v708, %v757
          %v759 = vrot.slane %v743, %v758
          %v760 = vlaneseq
          %v761 = vshrl.u32 %v760, 7
          %v762 = vsub.s32 %v708, %v761
          %v763 = vrot.slane %v745, %v762
          %v764 = vlaneseq
          %v765 = vshrl.u32 %v764, 7
          %v766 = vsub.s32 %v708, %v765
          %v767 = vrot.slane %v747, %v766
          %v768 = vsel %vm725, %v759, %v755
          %v769 = vsel %vm727, %v763, %v768
          %v770 = vsel %vm729, %v767, %v769
          %v772 = vsel %vm732, %v770, 0.0
          %773 = vadd.xlane.f32.xlu0 %v772
          %v774 = vpop.xlane.xlu0 %773
          %vm775 = vcmp.gt.f32.partialorder %v774, 0.0
          %v776 = vsel %vm775, 1, 0
          %v777 = vcvt.s32.f32 %v776
          %v778 = vmul.f32 %v735, %v777
          %vm779 = vcmask 1043456
          %v780 = vsel %vm779, %v778, 0.0
          %v781 = vrot.slane %v780, 4
          %v782 = vadd.f32 %v780, %v781
          %v783 = vrot.slane %v782, 2
          %v784 = vadd.f32 %v782, %v783
          %v785 = vrot.slane %v784, 1
          %v786 = vadd.f32 %v784, %v785
          %v787 = vld [vmem:[#allocation4] sm:$0xff]
          %788 = vadd.xlane.f32.xlu0 %v787
          %v789 = vpop.xlane.xlu0 %788
          %v790 = vrot.slane %v789, 4
          %v791 = vadd.f32 %v789, %v790
          %v792 = vrot.slane %v791, 2
          %v793 = vadd.f32 %v791, %v792
          %v794 = vrot.slane %v793, 1
          %v795 = vadd.f32 %v793, %v794
          %v796 = vmax.f32 %v795, 1.0
          %v797 = vrcp.pop %v796
          %v798 = vmul.f32 %v786, %v797
          %vm799 = vcmask 0
          %800 = vst.msk [vmem:[%s351] sm:$0x1] %vm799, %v798
        $region48: #{tpu_custom_call.1} parent=31 // pred_fallthru
          _
        %p801 = scmp.lt.s32.totalorder %s24, 1
        %s802 = scalar_select %p801, %s24, 1
        %s803 = scalar_lea.vmem %s3, %s802
        // Predicated region
        $region49: #{tpu_custom_call.1} parent=31 // pred_check
          %p804 = pneg %p134
        $region50: #{tpu_custom_call.1} parent=31 // pred_check_branch
          %806 = sbr.rel (%p804) target = $region52
        $region51: #{tpu_custom_call.1} parent=31 // pred_region
          _
        $region52: #{tpu_custom_call.1} parent=31 // pred_fallthru
          _
      $region32: #{tpu_custom_call.1} parent=5 // pred_fallthru
        _
      %p807 = scmp.le.s32.totalorder 2, %s15
      // Predicated region
      $region53: #{tpu_custom_call.1} parent=5 // pred_check
        %p808 = pneg %p807
      $region54: #{tpu_custom_call.1} parent=5 // pred_check_branch
        %810 = sbr.rel (%p808) target = $region56
      $region55: #{tpu_custom_call.1} parent=5 // pred_region
        %s811 = ssub.s32 %s15, 2
        // Predicated region
        $region57: #{tpu_custom_call.1} parent=55 // pred_check
          %p812 = pneg %p140
        $region58: #{tpu_custom_call.1} parent=55 // pred_check_branch
          %814 = sbr.rel (%p812) target = $region60
        $region59: #{tpu_custom_call.1} parent=55 // pred_region
          %p815 = scmp.lt.s32.totalorder %s26, 1
          %s816 = scalar_select %p815, %s26, 1
          %s817 = scalar_lea.vmem %s3, %s816
        $region60: #{tpu_custom_call.1} parent=55 // pred_fallthru
          _
      $region56: #{tpu_custom_call.1} parent=5 // pred_fallthru
        _
    $region6: #{tpu_custom_call.1} parent=1 // loop_footer
      %s19 = sadd.s32 1, %s15
    $region7: #{tpu_custom_call.1} parent=1 // loop_footer_branch
      %14 = sbr.rel target = $region3
    $region8: #{tpu_custom_call.1} parent=1 // loop_exit
      _
    %818 = vsyncpa [#allocation6], 1
    %s819 = scalar_lea.sflag [#allocation6], 1
    %820 = vsyncpa %s819, 1
    %821 = vsyncpa [#allocation8], 1
    %s822 = scalar_lea.sflag [#allocation8], 1
    %823 = vsyncpa %s822, 1

</llo_original>
